<compile_context>
chip_gen: v5e
topology: v5e:2x2
jax: 0.10.0
libtpu: 0.0.40
codegen_flags: <defaults>
</compile_context>

<pallas_src>
import math

import jax
import jax.numpy as jnp
from jax.experimental import pallas as pl
from jax.experimental.pallas import tpu as pltpu

LANE = 128
SUBLANE = 8


def _round_up(x, m):
    return ((x + m - 1) // m) * m


def _support_kernel(x_ref, w_ref, s_ref):
    # support = X_tile @ W   (MXU matmul, f32 accumulate)
    s_ref[...] = jnp.dot(
        x_ref[...], w_ref[...], preferred_element_type=jnp.float32
    )


def _spmm_bias_kernel(adj_ref, s_ref, b_ref, out_ref):
    # out_tile = A_tile @ support + bias   (row tile of the aggregation)
    acc = jnp.dot(adj_ref[...], s_ref[...], preferred_element_type=jnp.float32)
    out_ref[...] = (acc + b_ref[...]).astype(out_ref.dtype)


def graph_convolution(x, adj, weight, bias=None, *, vmem_budget_bytes=48 << 20):
    """Pallas GCN layer: adj @ (x @ weight) + bias."""
    n, f_in = x.shape
    f_out = weight.shape[1]
    assert adj.shape == (n, n)
    assert weight.shape == (f_in, f_out)

    # ---- lane-dense output: pad F_out up to a multiple of 128 -------------
    f_out_p = _round_up(f_out, LANE)
    w_p = jnp.zeros((f_in, f_out_p), x.dtype).at[:, :f_out].set(
        weight.astype(x.dtype)
    )
    if bias is None:
        b_p = jnp.zeros((1, f_out_p), x.dtype)
    else:
        b_p = jnp.zeros((1, f_out_p), x.dtype).at[0, :f_out].set(
            bias.astype(x.dtype)
        )

    # ---- row tile size: MXU-friendly (<=256), sized to fit VMEM budget ----
    tm = min(256, _round_up(n, SUBLANE))
    while tm > SUBLANE:
        n_pad = _round_up(n, tm)
        need = 4 * (
            2 * tm * n_pad          # adj row tile, double buffered
            + 2 * n_pad * f_out_p   # resident support
            + 2 * tm * f_out_p      # output tile, double buffered
            + tm * f_in             # x tile (stage 1)
            + f_in * f_out_p        # weight (stage 1)
        )
        if need <= vmem_budget_bytes:
            break
        tm //= 2
    n_pad = _round_up(n, tm)
    grid = (n_pad // tm,)

    # ---- pad the node dim (zero rows/cols contribute nothing) -------------
    x_p = jnp.zeros((n_pad, f_in), x.dtype).at[:n, :].set(x)
    adj_p = jnp.zeros((n_pad, n_pad), x.dtype).at[:n, :n].set(
        adj.astype(x.dtype)
    )

    compiler_params = pltpu.CompilerParams(
        dimension_semantics=("parallel",),   # row tiles split across TCs on v7x
        vmem_limit_bytes=vmem_budget_bytes,
    )

    # ---- stage 1: support = X @ W (computed exactly once, row-tiled) ------
    support = pl.pallas_call(
        _support_kernel,
        out_shape=jax.ShapeDtypeStruct((n_pad, f_out_p), jnp.float32),
        grid=grid,
        in_specs=[
            pl.BlockSpec((tm, f_in), lambda i: (i, 0)),
            pl.BlockSpec((f_in, f_out_p), lambda i: (0, 0)),
        ],
        out_specs=pl.BlockSpec((tm, f_out_p), lambda i: (i, 0)),
        compiler_params=compiler_params,
        cost_estimate=pl.CostEstimate(
            flops=2 * n_pad * f_in * f_out_p,
            transcendentals=0,
            bytes_accessed=4
            * (n_pad * f_in + f_in * f_out_p + n_pad * f_out_p),
        ),
    )(x_p, w_p)

    # ---- stage 2: out = adj @ support + bias (row-tiled SpMM) --------------
    out_p = pl.pallas_call(
        _spmm_bias_kernel,
        out_shape=jax.ShapeDtypeStruct((n_pad, f_out_p), jnp.float32),
        grid=grid,
        in_specs=[
            pl.BlockSpec((tm, n_pad), lambda i: (i, 0)),
            pl.BlockSpec((n_pad, f_out_p), lambda i: (0, 0)),
            pl.BlockSpec((1, f_out_p), lambda i: (0, 0)),
        ],
        out_specs=pl.BlockSpec((tm, f_out_p), lambda i: (i, 0)),
        compiler_params=compiler_params,
        cost_estimate=pl.CostEstimate(
            flops=2 * n_pad * n_pad * f_out_p,
            transcendentals=0,
            bytes_accessed=4
            * (n_pad * n_pad + 2 * n_pad * f_out_p + f_out_p),
        ),
    )(adj_p, support, b_p)

    # Slice padding back off.
    return out_p[:n, :f_out]


if __name__ == "__main__":
    # Small GCN problem: N nodes, in_features -> out_features.
    N, in_features, out_features = 128, 64, 32

    key = jax.random.PRNGKey(0)
    k_x, k_adj, k_w, k_b = jax.random.split(key, 4)

    # Inputs
    x = jax.random.normal(k_x, (N, in_features), dtype=jnp.float32)
    # Dense "sparse" adjacency (row-normalized-ish random graph)
    adj_raw = (jax.random.uniform(k_adj, (N, N)) < 0.1).astype(jnp.float32)
    adj = adj_raw + jnp.eye(N, dtype=jnp.float32)
    adj = adj / jnp.maximum(adj.sum(axis=1, keepdims=True), 1.0)

    # Deterministic parameter init mirroring reset_parameters():
    # uniform(-stdv, stdv) with stdv = 1/sqrt(out_features)
    stdv = 1.0 / math.sqrt(out_features)
    weight = jax.random.uniform(
        k_w, (in_features, out_features), minval=-stdv, maxval=stdv,
        dtype=jnp.float32)
    bias = jax.random.uniform(
        k_b, (out_features,), minval=-stdv, maxval=stdv, dtype=jnp.float32)

    out = graph_convolution(x, adj, weight, bias)
    out = jax.block_until_ready(out)

    # Reference check in plain JAX
    ref = adj @ (x @ weight) + bias[None, :]
    assert out.shape == (N, out_features)
    assert jnp.allclose(out, ref, atol=1e-4, rtol=1e-4)

    # Also exercise the bias=None path of the module.
    out_nb = jax.block_until_ready(graph_convolution(x, adj, weight, None))
    assert jnp.allclose(out_nb, adj @ (x @ weight), atol=1e-4, rtol=1e-4)

    print("KERNEL_OK")
</pallas_src>

<mosaic_0001>
module attributes {stable_mosaic.version = 11 : i64} {
  func.func @_support_kernel(%arg0: i32, %arg1: memref<128x64xf32, #tpu.memory_space<vmem>>, %arg2: memref<64x128xf32, #tpu.memory_space<vmem>>, %arg3: memref<128x128xf32, #tpu.memory_space<vmem>>) attributes {dimension_semantics = [#tpu.dimension_semantics<parallel>], iteration_bounds = array<i64: 1>, scalar_prefetch = 0 : i64, scratch_operands = 0 : i64, tpu.core_type = #tpu.core_type<tc>, window_params = [{transform_indices = @transform_0, window_bounds = array<i64: 128, 64>}, {pipeline_mode = #tpu.pipeline_mode<synchronous>, transform_indices = @transform_1, window_bounds = array<i64: 64, 128>}, {transform_indices = @transform_2, window_bounds = array<i64: 128, 128>}]} {
    %c0 = arith.constant 0 : index
    %c0_0 = arith.constant 0 : index
    %0 = vector.load %arg1[%c0, %c0_0] : memref<128x64xf32, #tpu.memory_space<vmem>>, vector<128x64xf32>
    %c0_1 = arith.constant 0 : index
    %c0_2 = arith.constant 0 : index
    %1 = vector.load %arg2[%c0_1, %c0_2] : memref<64x128xf32, #tpu.memory_space<vmem>>, vector<64x128xf32>
    %cst = arith.constant dense<0.000000e+00> : vector<128x128xf32>
    %2 = tpu.matmul %0, %1, %cst {dimension_numbers = #tpu.dot_dimension_numbers<[1], [0], [0], [1], [0, 0, 1, 1], [], []>} : vector<128x64xf32>, vector<64x128xf32>, vector<128x128xf32> -> vector<128x128xf32>
    %c0_3 = arith.constant 0 : index
    %c0_4 = arith.constant 0 : index
    %3 = vector.load %arg3[%c0_3, %c0_4] : memref<128x128xf32, #tpu.memory_space<vmem>>, vector<128x128xf32>
    tpu.vector_store %arg3[%c0_3, %c0_4], %2 {strides = array<i32>} : memref<128x128xf32, #tpu.memory_space<vmem>>, vector<128x128xf32>,
    return
  }
  func.func @transform_0(%arg0: i32) -> (i32, i32) {
    %c0_i32 = arith.constant 0 : i32
    %c0_i32_0 = arith.constant 0 : i32
    return %arg0, %c0_i32 : i32, i32
  }
  func.func @transform_1(%arg0: i32) -> (i32, i32) {
    %c0_i32 = arith.constant 0 : i32
    %c0_i32_0 = arith.constant 0 : i32
    %c0_i32_1 = arith.constant 0 : i32
    return %c0_i32, %c0_i32_0 : i32, i32
  }
  func.func @transform_2(%arg0: i32) -> (i32, i32) {
    %c0_i32 = arith.constant 0 : i32
    %c0_i32_0 = arith.constant 0 : i32
    return %arg0, %c0_i32 : i32, i32
  }
}

</mosaic_0001>

<llo_original>
// kernel: tpu_custom_call.1
$region0: #{tpu_custom_call.1}
  #allocation0 [shape = 'u32[]', space=smem, size = 0x4, offset = 0x4, fixed_abs, tag = 'smem constant byte address 0x4 - core index']
  #allocation1 [shape = 'u32[72,128]{1,0:T(1,128)}', space=vmem, size = 0x9000, scoped, tag = 'internal scratch']
  %s0 = inlined_call_operand.vmem [shape: f32[128,64], index: 0, kind: input, shape index: {}]
  %s1 = inlined_call_operand.vmem [shape: f32[64,128], index: 1, kind: input, shape index: {}]
  %s2 = inlined_call_operand.hbm [shape: f32[128,128], index: 2, kind: output, shape index: {}]
  %s3 = sld [smem:[#allocation0]]
  $region18: #{tpu_custom_call.1} parent=0
    _
  %s5 = ssub.s32 1, %s3
  %s6 = scalar_select 0, %s5, %s3
  $region1: #{tpu_custom_call.1} parent=0
    #allocation2 [shape = 'u8[65536]{0}', space=vmem, size = 0x10000, scoped, tag = 'output window, operand 0, single buffered']
    #allocation3 [shape = 's32[1]{0}', space=sflag, size = 0x4, scoped, tag = 'scoped memory for tpu_custom_call.1']
    %7 = vsyncpa [#allocation3], 0
    // Predicated region
    $region2: #{tpu_custom_call.1} parent=1 // pred_check
      _
    $region3: #{tpu_custom_call.1} parent=1 // pred_check_branch
      %9 = sbr.rel (0) target = $region5
    $region4: #{tpu_custom_call.1} parent=1 // pred_region
      _
    $region5: #{tpu_custom_call.1} parent=1 // pred_fallthru
      _
    // Predicated region
    $region6: #{tpu_custom_call.1} parent=1 // pred_check
      _
    $region7: #{tpu_custom_call.1} parent=1 // pred_check_branch
      %11 = sbr.rel (0) target = $region9
    $region8: #{tpu_custom_call.1} parent=1 // pred_region
      _
    $region9: #{tpu_custom_call.1} parent=1 // pred_fallthru
      _
    %v12 = vld [vmem:[%s0] sm:$0xff]
    %v13 = vld [vmem:[%s0 + $0x8] sm:$0xff]
    %v14 = vld [vmem:[%s0 + $0x10] sm:$0xff]
    %v15 = vld [vmem:[%s0 + $0x18] sm:$0xff]
    %v16 = vld [vmem:[%s0 + $0x20] sm:$0xff]
    %v17 = vld [vmem:[%s0 + $0x28] sm:$0xff]
    %v18 = vld [vmem:[%s0 + $0x30] sm:$0xff]
    %v19 = vld [vmem:[%s0 + $0x38] sm:$0xff]
    %v20 = vld [vmem:[%s0 + $0x40] sm:$0xff]
    %v21 = vld [vmem:[%s0 + $0x48] sm:$0xff]
    %v22 = vld [vmem:[%s0 + $0x50] sm:$0xff]
    %v23 = vld [vmem:[%s0 + $0x58] sm:$0xff]
    %v24 = vld [vmem:[%s0 + $0x60] sm:$0xff]
    %v25 = vld [vmem:[%s0 + $0x68] sm:$0xff]
    %v26 = vld [vmem:[%s0 + $0x70] sm:$0xff]
    %v27 = vld [vmem:[%s0 + $0x78] sm:$0xff]
    %v28 = vld [vmem:[%s1] sm:$0xff]
    %v29 = vld [vmem:[%s1 + $0x8] sm:$0xff]
    %v30 = vld [vmem:[%s1 + $0x10] sm:$0xff]
    %v31 = vld [vmem:[%s1 + $0x18] sm:$0xff]
    %v32 = vld [vmem:[%s1 + $0x20] sm:$0xff]
    %v33 = vld [vmem:[%s1 + $0x28] sm:$0xff]
    %v34 = vld [vmem:[%s1 + $0x30] sm:$0xff]
    %v35 = vld [vmem:[%s1 + $0x38] sm:$0xff]
    %vm36 = vcmask 523264
    %v38 = vsel %vm36, %v12, 0
    %v41 = vsel %vm36, %v13, 0
    %v44 = vsel %vm36, %v14, 0
    %v47 = vsel %vm36, %v15, 0
    %v50 = vsel %vm36, %v16, 0
    %v53 = vsel %vm36, %v17, 0
    %v56 = vsel %vm36, %v18, 0
    %v59 = vsel %vm36, %v19, 0
    %v62 = vsel %vm36, %v20, 0
    %v65 = vsel %vm36, %v21, 0
    %v68 = vsel %vm36, %v22, 0
    %v71 = vsel %vm36, %v23, 0
    %v74 = vsel %vm36, %v24, 0
    %v77 = vsel %vm36, %v25, 0
    %v80 = vsel %vm36, %v26, 0
    %v83 = vsel %vm36, %v27, 0
    %85 = vmatpush.msra.mxu0 0.0
    %86 = vmatpush.msra.mxu0 0.0
    %87 = vmatpush.msra.mxu0 0.0
    %88 = vmatpush.msra.mxu0 0.0
    %89 = vmatpush.msra.mxu0 0.0
    %90 = vmatpush.msra.mxu0 0.0
    %91 = vmatpush.msra.mxu0 0.0
    %92 = vmatpush.msra.mxu0 0.0
    %93 = vmatpush.msra.mxu0 %v35
    %94 = vmatpush.msra.mxu0 %v34
    %95 = vmatpush.msra.mxu0 %v33
    %96 = vmatpush.msra.mxu0 %v32
    %97 = vmatpush.msra.mxu0 %v31
    %98 = vmatpush.msra.mxu0 %v30
    %99 = vmatpush.msra.mxu0 %v29
    %100 = vmatpush.msra.mxu0 %v28
    %101 = vmatmul.f32.gmra.mxu0 %v38
    %v102 = vpop.f32.mrf.mxu0
    %v103 = vadd.f32 0.0, %v102
    %104 = vmatmul.f32.gmra.mxu0 %v41
    %v105 = vpop.f32.mrf.mxu0
    %v106 = vadd.f32 0.0, %v105
    %107 = vmatmul.f32.gmra.mxu0 %v44
    %v108 = vpop.f32.mrf.mxu0
    %v109 = vadd.f32 0.0, %v108
    %110 = vmatmul.f32.gmra.mxu0 %v47
    %v111 = vpop.f32.mrf.mxu0
    %v112 = vadd.f32 0.0, %v111
    %113 = vmatmul.f32.gmra.mxu0 %v50
    %v114 = vpop.f32.mrf.mxu0
    %v115 = vadd.f32 0.0, %v114
    %116 = vmatmul.f32.gmra.mxu0 %v53
    %v117 = vpop.f32.mrf.mxu0
    %v118 = vadd.f32 0.0, %v117
    %119 = vmatmul.f32.gmra.mxu0 %v56
    %v120 = vpop.f32.mrf.mxu0
    %v121 = vadd.f32 0.0, %v120
    %122 = vmatmul.f32.gmra.mxu0 %v59
    %v123 = vpop.f32.mrf.mxu0
    %v124 = vadd.f32 0.0, %v123
    %125 = vmatmul.f32.gmra.mxu0 %v62
    %v126 = vpop.f32.mrf.mxu0
    %v127 = vadd.f32 0.0, %v126
    %128 = vmatmul.f32.gmra.mxu0 %v65
    %v129 = vpop.f32.mrf.mxu0
    %v130 = vadd.f32 0.0, %v129
    %131 = vmatmul.f32.gmra.mxu0 %v68
    %v132 = vpop.f32.mrf.mxu0
    %v133 = vadd.f32 0.0, %v132
    %134 = vmatmul.f32.gmra.mxu0 %v71
    %v135 = vpop.f32.mrf.mxu0
    %v136 = vadd.f32 0.0, %v135
    %137 = vmatmul.f32.gmra.mxu0 %v74
    %v138 = vpop.f32.mrf.mxu0
    %v139 = vadd.f32 0.0, %v138
    %140 = vmatmul.f32.gmra.mxu0 %v77
    %v141 = vpop.f32.mrf.mxu0
    %v142 = vadd.f32 0.0, %v141
    %143 = vmatmul.f32.gmra.mxu0 %v80
    %v144 = vpop.f32.mrf.mxu0
    %v145 = vadd.f32 0.0, %v144
    %146 = vmatmul.f32.gmra.mxu0 %v83
    %v147 = vpop.f32.mrf.mxu0
    %v148 = vadd.f32 0.0, %v147
    %149 = vdwg.mxu0
    %150 = vst [vmem:[#allocation2] sm:$0xff] %v103
    %151 = vst [vmem:[#allocation2 + $0x8] sm:$0xff] %v106
    %152 = vst [vmem:[#allocation2 + $0x10] sm:$0xff] %v109
    %153 = vst [vmem:[#allocation2 + $0x18] sm:$0xff] %v112
    %154 = vst [vmem:[#allocation2 + $0x20] sm:$0xff] %v115
    %155 = vst [vmem:[#allocation2 + $0x28] sm:$0xff] %v118
    %156 = vst [vmem:[#allocation2 + $0x30] sm:$0xff] %v121
    %157 = vst [vmem:[#allocation2 + $0x38] sm:$0xff] %v124
    %158 = vst [vmem:[#allocation2 + $0x40] sm:$0xff] %v127
    %159 = vst [vmem:[#allocation2 + $0x48] sm:$0xff] %v130
    %160 = vst [vmem:[#allocation2 + $0x50] sm:$0xff] %v133
    %161 = vst [vmem:[#allocation2 + $0x58] sm:$0xff] %v136
    %162 = vst [vmem:[#allocation2 + $0x60] sm:$0xff] %v139
    %163 = vst [vmem:[#allocation2 + $0x68] sm:$0xff] %v142
    %164 = vst [vmem:[#allocation2 + $0x70] sm:$0xff] %v145
    %165 = vst [vmem:[#allocation2 + $0x78] sm:$0xff] %v148
    // Predicated region
    $region10: #{tpu_custom_call.1} parent=1 // pred_check
      _
    $region11: #{tpu_custom_call.1} parent=1 // pred_check_branch
      %167 = sbr.rel (0) target = $region13
    $region12: #{tpu_custom_call.1} parent=1 // pred_region
      %169 = vsyncadd [#allocation3], 0
      %s170 = sshll.u32 [#allocation2], 4
      %s171 = int_to_ptr.vmem [resolvable:$true] %s170
      %s172 = sshll.u32 %s2, 4
      %s173 = int_to_ptr.hbm [resolvable:$true] %s172
      %178 = dma.vmem_to_hbm [thread:$0]  %s171, 2048, %s173, [#allocation3], 128, 128, 8
    $region13: #{tpu_custom_call.1} parent=1 // pred_fallthru
      _
    // Predicated region
    $region14: #{tpu_custom_call.1} parent=1 // pred_check
      _
    $region15: #{tpu_custom_call.1} parent=1 // pred_check_branch
      %180 = sbr.rel (0) target = $region17
    $region16: #{tpu_custom_call.1} parent=1 // pred_region
      %182 = dma.done [#allocation3], 2048
    $region17: #{tpu_custom_call.1} parent=1 // pred_fallthru
      _
    %183 = vsyncpa [#allocation3], 1

</llo_original>
